<compile_context>
chip_gen: v7x
topology: tpu7x:2x2x1
jax: 0.10.0
libtpu: 0.0.40
codegen_flags: <defaults>
</compile_context>

<pallas_src>
import functools

import jax
import jax.numpy as jnp
from jax.experimental import pallas as pl
from jax.experimental.pallas import tpu as pltpu


def _concat_h_kernel(x_ref, y_ref, o_ref, *, hx):
    # x_ref: (T, HX, W), y_ref: (T, HY, W), o_ref: (T, HX + HY, W)
    # Concatenation along the sublane (H) axis: two contiguous slab stores into
    # disjoint sublane ranges of the output block.  With HX a multiple of the
    # packed sublane count (8 for f32, 16 for bf16, 32 for int8/fp8) both stores
    # are sublane-aligned and unmasked along H.
    o_ref[:, :hx, :] = x_ref[...]
    o_ref[:, hx:, :] = y_ref[...]


def concat_dim2(
    x: jax.Array,
    y: jax.Array,
    *,
    vmem_budget_bytes: int = 20 * 1024 * 1024,
) -> jax.Array:
    """Concatenate x and y along axis 2 (NCHW layout) with a Pallas TPU kernel."""
    assert x.ndim == 4 and y.ndim == 4
    B, C, HX, W = x.shape
    By, Cy, HY, Wy = y.shape
    assert (B, C, W) == (By, Cy, Wy), "all dims except dim=2 must match"
    assert x.dtype == y.dtype
    HO = HX + HY
    itemsize = jnp.dtype(x.dtype).itemsize

    # Merge ONLY the leading (untiled) dims B, C -> R.  This does not touch the
    # minor (H, W) dims, so it is a free bitcast on TPU: no relayout copies
    # bracket the pallas_call (unlike flattening H*W into the lane dim).
    R = B * C
    x3 = x.reshape(R, HX, W)
    y3 = y.reshape(R, HY, W)

    # Padding-aware per-row VMEM footprint: lanes pad to 128, sublanes pad to
    # 8 * (32 // bits) (f32: 8, bf16: 16, int8/fp8: 32).
    sub = 8 * max(1, 4 // itemsize)
    w_pad = -(-W // 128) * 128
    pad_h = lambda h: -(-h // sub) * sub
    per_row_bytes = (pad_h(HX) + pad_h(HY) + pad_h(HO)) * w_pad * itemsize
    resident_per_row = 2 * per_row_bytes  # x + y + out blocks, double-buffered

    # Row tile over the leading (plane) dim — no sublane/lane constraint on it.
    T = min(R, max(1, vmem_budget_bytes // resident_per_row))
    resident = T * resident_per_row
    # TODO(synk): for pathological single planes where even T=1 exceeds the v7x
    # budget, add an H-chunking grid axis (or an HBM->HBM DMA path) instead of
    # relying on the raised vmem_limit below.
    vmem_limit = min(
        48 * 1024 * 1024,  # stay well under v7x's 64 MiB per-TC physical VMEM
        max(16 * 1024 * 1024, resident + 4 * 1024 * 1024),  # Mosaic scratch headroom
    )

    grid = (pl.cdiv(R, T),)
    total_bytes = (R * HX * W + R * HY * W + R * HO * W) * itemsize  # read + write

    kernel = functools.partial(_concat_h_kernel, hx=HX)

    out3 = pl.pallas_call(
        kernel,
        out_shape=jax.ShapeDtypeStruct((R, HO, W), x.dtype),
        grid=grid,
        in_specs=[
            pl.BlockSpec((T, HX, W), lambda r: (r, 0, 0)),
            pl.BlockSpec((T, HY, W), lambda r: (r, 0, 0)),
        ],
        out_specs=pl.BlockSpec((T, HO, W), lambda r: (r, 0, 0)),
        compiler_params=pltpu.CompilerParams(
            # TODO(synk): on v7x, pltpu.CORE_PARALLEL here would split the copy
            # across both TensorCores' DMA queues; "parallel" kept for
            # portability across v5e/v6e/v7x.
            dimension_semantics=("parallel",),
            vmem_limit_bytes=vmem_limit,
        ),
        cost_estimate=pl.CostEstimate(
            flops=0, transcendentals=0, bytes_accessed=total_bytes
        ),
    )(x3, y3)

    # Splitting the leading dim back to (B, C) is likewise a free bitcast.
    return out3.reshape(B, C, HO, W)


if __name__ == "__main__":
    key = jax.random.PRNGKey(0)
    kx, ky = jax.random.split(key)

    # Small shapes consistent with the module: NCHW, concat along dim=2 (H).
    x = jax.random.normal(kx, (2, 4, 16, 16), dtype=jnp.float32)
    y = jax.random.normal(ky, (2, 4, 8, 16), dtype=jnp.float32)

    out = jax.block_until_ready(concat_dim2(x, y))

    ref = jnp.concatenate((x, y), axis=2)
    assert out.shape == (2, 4, 24, 16), out.shape
    assert jnp.array_equal(out, ref), "Pallas concat mismatch vs jnp.concatenate"

    print("KERNEL_OK")
</pallas_src>

<mosaic_0001>
module attributes {stable_mosaic.version = 11 : i64} {
  func.func @_concat_h_kernel(%arg0: i32, %arg1: memref<8x16x16xf32, #tpu.memory_space<vmem>>, %arg2: memref<8x8x16xf32, #tpu.memory_space<vmem>>, %arg3: memref<8x24x16xf32, #tpu.memory_space<vmem>>) attributes {dimension_semantics = [#tpu.dimension_semantics<parallel>], iteration_bounds = array<i64: 1>, scalar_prefetch = 0 : i64, scratch_operands = 0 : i64, tpu.core_type = #tpu.core_type<tc>, window_params = [{transform_indices = @transform_0, window_bounds = array<i64: 8, 16, 16>}, {transform_indices = @transform_1, window_bounds = array<i64: 8, 8, 16>}, {transform_indices = @transform_2, window_bounds = array<i64: 8, 24, 16>}]} {
    %c0 = arith.constant 0 : index
    %c0_0 = arith.constant 0 : index
    %c0_1 = arith.constant 0 : index
    %0 = vector.load %arg1[%c0, %c0_0, %c0_1] : memref<8x16x16xf32, #tpu.memory_space<vmem>>, vector<8x16x16xf32>
    %c0_2 = arith.constant 0 : index
    %c0_3 = arith.constant 0 : index
    %c0_4 = arith.constant 0 : index
    %1 = vector.load %arg3[%c0_2, %c0_3, %c0_4] : memref<8x24x16xf32, #tpu.memory_space<vmem>>, vector<8x16x16xf32>
    tpu.vector_store %arg3[%c0_2, %c0_3, %c0_4], %0 {strides = array<i32>} : memref<8x24x16xf32, #tpu.memory_space<vmem>>, vector<8x16x16xf32>,
    %c0_5 = arith.constant 0 : index
    %c0_6 = arith.constant 0 : index
    %c0_7 = arith.constant 0 : index
    %2 = vector.load %arg2[%c0_5, %c0_6, %c0_7] : memref<8x8x16xf32, #tpu.memory_space<vmem>>, vector<8x8x16xf32>
    %c0_8 = arith.constant 0 : index
    %c16 = arith.constant 16 : index
    %c0_9 = arith.constant 0 : index
    %3 = vector.load %arg3[%c0_8, %c16, %c0_9] : memref<8x24x16xf32, #tpu.memory_space<vmem>>, vector<8x8x16xf32>
    tpu.vector_store %arg3[%c0_8, %c16, %c0_9], %2 {strides = array<i32>} : memref<8x24x16xf32, #tpu.memory_space<vmem>>, vector<8x8x16xf32>,
    return
  }
  func.func @transform_0(%arg0: i32) -> (i32, i32, i32) {
    %c0_i32 = arith.constant 0 : i32
    %c0_i32_0 = arith.constant 0 : i32
    %c0_i32_1 = arith.constant 0 : i32
    return %arg0, %c0_i32, %c0_i32_0 : i32, i32, i32
  }
  func.func @transform_1(%arg0: i32) -> (i32, i32, i32) {
    %c0_i32 = arith.constant 0 : i32
    %c0_i32_0 = arith.constant 0 : i32
    %c0_i32_1 = arith.constant 0 : i32
    return %arg0, %c0_i32, %c0_i32_0 : i32, i32, i32
  }
  func.func @transform_2(%arg0: i32) -> (i32, i32, i32) {
    %c0_i32 = arith.constant 0 : i32
    %c0_i32_0 = arith.constant 0 : i32
    %c0_i32_1 = arith.constant 0 : i32
    return %arg0, %c0_i32, %c0_i32_0 : i32, i32, i32
  }
}

</mosaic_0001>

<llo_original>
// kernel: tpu_custom_call.1
$region0: #{tpu_custom_call.1}
  #allocation0 [shape = 'u32[]', space=smem, size = 0x4, offset = 0x4, fixed_abs, tag = 'smem constant byte address 0x4 - core index']
  #allocation1 [shape = 'u32[144,128]{1,0:T(1,128)}', space=vmem, size = 0x12000, scoped, tag = 'internal scratch']
  %s0 = inlined_call_operand.hbm [shape: f32[8,16,16], index: 0, kind: input, shape index: {}]
  %s1 = inlined_call_operand.hbm [shape: f32[8,8,16], index: 1, kind: input, shape index: {}]
  %s2 = inlined_call_operand.vmem [shape: f32[8,24,16], index: 2, kind: output, shape index: {}]
  %s3 = sld [smem:[#allocation0]]
  $region26: #{tpu_custom_call.1} parent=0
    _
  %s5 = ssub.s32 1, %s3
  %s6 = scalar_select 0, %s5, %s3
  $region1: #{tpu_custom_call.1} parent=0
    #allocation2 [shape = 'u8[65536]{0}', space=vmem, size = 0x10000, scoped, tag = 'input window, operand 0, single buffered']
    #allocation3 [shape = 's32[1]{0}', space=sflag, size = 0x4, scoped, tag = 'scoped memory for tpu_custom_call.1']
    #allocation4 [shape = 'u8[32768]{0}', space=vmem, size = 0x8000, scoped, tag = 'input window, operand 1, single buffered']
    #allocation5 [shape = 's32[1]{0}', space=sflag, size = 0x4, scoped, tag = 'scoped memory for tpu_custom_call.1']
    %7 = vsyncpa [#allocation3], 0
    %8 = vsyncpa [#allocation5], 0
    // Predicated region
    $region2: #{tpu_custom_call.1} parent=1 // pred_check
      _
    $region3: #{tpu_custom_call.1} parent=1 // pred_check_branch
      %10 = sbr.rel (0) target = $region5
    $region4: #{tpu_custom_call.1} parent=1 // pred_region
      %s12 = ssub.s32 2048, 2048
      %13 = vsyncadd [#allocation3], %s12
      %s14 = sshll.u32 [#allocation2], 4
      %s15 = int_to_ptr.vmem [resolvable:$true] %s14
      %20 = dma.hbm_to_vmem [thread:$0]  %s0, 2048, %s15, [#allocation3], 128, 128, 8
    $region5: #{tpu_custom_call.1} parent=1 // pred_fallthru
      _
    // Predicated region
    $region6: #{tpu_custom_call.1} parent=1 // pred_check
      _
    $region7: #{tpu_custom_call.1} parent=1 // pred_check_branch
      %22 = sbr.rel (0) target = $region9
    $region8: #{tpu_custom_call.1} parent=1 // pred_region
      %s24 = ssub.s32 1024, 1024
      %25 = vsyncadd [#allocation5], %s24
      %s26 = sshll.u32 [#allocation4], 4
      %s27 = int_to_ptr.vmem [resolvable:$true] %s26
      %32 = dma.hbm_to_vmem [thread:$0]  %s1, 1024, %s27, [#allocation5], 128, 128, 8
    $region9: #{tpu_custom_call.1} parent=1 // pred_fallthru
      _
    // Predicated region
    $region10: #{tpu_custom_call.1} parent=1 // pred_check
      _
    $region11: #{tpu_custom_call.1} parent=1 // pred_check_branch
      %34 = sbr.rel (0) target = $region13
    $region12: #{tpu_custom_call.1} parent=1 // pred_region
      %35 = dma.done [#allocation3], 2048
    $region13: #{tpu_custom_call.1} parent=1 // pred_fallthru
      _
    // Predicated region
    $region14: #{tpu_custom_call.1} parent=1 // pred_check
      _
    $region15: #{tpu_custom_call.1} parent=1 // pred_check_branch
      %37 = sbr.rel (0) target = $region17
    $region16: #{tpu_custom_call.1} parent=1 // pred_region
      %38 = dma.done [#allocation5], 1024
    $region17: #{tpu_custom_call.1} parent=1 // pred_fallthru
      _
    %v39 = vld [vmem:[#allocation2] sm:$0xff]
    %v40 = vld [vmem:[#allocation2 + $0x8] sm:$0xff]
    %v41 = vld [vmem:[#allocation2 + $0x10] sm:$0xff]
    %v42 = vld [vmem:[#allocation2 + $0x18] sm:$0xff]
    %v43 = vld [vmem:[#allocation2 + $0x20] sm:$0xff]
    %v44 = vld [vmem:[#allocation2 + $0x28] sm:$0xff]
    %v45 = vld [vmem:[#allocation2 + $0x30] sm:$0xff]
    %v46 = vld [vmem:[#allocation2 + $0x38] sm:$0xff]
    %v47 = vld [vmem:[#allocation2 + $0x40] sm:$0xff]
    %v48 = vld [vmem:[#allocation2 + $0x48] sm:$0xff]
    %v49 = vld [vmem:[#allocation2 + $0x50] sm:$0xff]
    %v50 = vld [vmem:[#allocation2 + $0x58] sm:$0xff]
    %v51 = vld [vmem:[#allocation2 + $0x60] sm:$0xff]
    %v52 = vld [vmem:[#allocation2 + $0x68] sm:$0xff]
    %v53 = vld [vmem:[#allocation2 + $0x70] sm:$0xff]
    %v54 = vld [vmem:[#allocation2 + $0x78] sm:$0xff]
    %vm55 = vcmask 130048
    %56 = vst.msk [vmem:[%s2] sm:$0xff] %vm55, %v39
    %57 = vst.msk [vmem:[%s2 + $0x8] sm:$0xff] %vm55, %v40
    %58 = vst.msk [vmem:[%s2 + $0x18] sm:$0xff] %vm55, %v41
    %59 = vst.msk [vmem:[%s2 + $0x20] sm:$0xff] %vm55, %v42
    %60 = vst.msk [vmem:[%s2 + $0x30] sm:$0xff] %vm55, %v43
    %61 = vst.msk [vmem:[%s2 + $0x38] sm:$0xff] %vm55, %v44
    %62 = vst.msk [vmem:[%s2 + $0x48] sm:$0xff] %vm55, %v45
    %63 = vst.msk [vmem:[%s2 + $0x50] sm:$0xff] %vm55, %v46
    %64 = vst.msk [vmem:[%s2 + $0x60] sm:$0xff] %vm55, %v47
    %65 = vst.msk [vmem:[%s2 + $0x68] sm:$0xff] %vm55, %v48
    %66 = vst.msk [vmem:[%s2 + $0x78] sm:$0xff] %vm55, %v49
    %67 = vst.msk [vmem:[%s2 + $0x80] sm:$0xff] %vm55, %v50
    %68 = vst.msk [vmem:[%s2 + $0x90] sm:$0xff] %vm55, %v51
    %69 = vst.msk [vmem:[%s2 + $0x98] sm:$0xff] %vm55, %v52
    %70 = vst.msk [vmem:[%s2 + $0xa8] sm:$0xff] %vm55, %v53
    %71 = vst.msk [vmem:[%s2 + $0xb0] sm:$0xff] %vm55, %v54
    %v72 = vld [vmem:[#allocation4] sm:$0xff]
    %v73 = vld [vmem:[#allocation4 + $0x8] sm:$0xff]
    %v74 = vld [vmem:[#allocation4 + $0x10] sm:$0xff]
    %v75 = vld [vmem:[#allocation4 + $0x18] sm:$0xff]
    %v76 = vld [vmem:[#allocation4 + $0x20] sm:$0xff]
    %v77 = vld [vmem:[#allocation4 + $0x28] sm:$0xff]
    %v78 = vld [vmem:[#allocation4 + $0x30] sm:$0xff]
    %v79 = vld [vmem:[#allocation4 + $0x38] sm:$0xff]
    %80 = vst.msk [vmem:[%s2 + $0x10] sm:$0xff] %vm55, %v72
    %81 = vst.msk [vmem:[%s2 + $0x28] sm:$0xff] %vm55, %v73
    %82 = vst.msk [vmem:[%s2 + $0x40] sm:$0xff] %vm55, %v74
    %83 = vst.msk [vmem:[%s2 + $0x58] sm:$0xff] %vm55, %v75
    %84 = vst.msk [vmem:[%s2 + $0x70] sm:$0xff] %vm55, %v76
    %85 = vst.msk [vmem:[%s2 + $0x88] sm:$0xff] %vm55, %v77
    %86 = vst.msk [vmem:[%s2 + $0xa0] sm:$0xff] %vm55, %v78
    %87 = vst.msk [vmem:[%s2 + $0xb8] sm:$0xff] %vm55, %v79
    // Predicated region
    $region18: #{tpu_custom_call.1} parent=1 // pred_check
      _
    $region19: #{tpu_custom_call.1} parent=1 // pred_check_branch
      %89 = sbr.rel (0) target = $region21
    $region20: #{tpu_custom_call.1} parent=1 // pred_region
      _
    $region21: #{tpu_custom_call.1} parent=1 // pred_fallthru
      _
    // Predicated region
    $region22: #{tpu_custom_call.1} parent=1 // pred_check
      _
    $region23: #{tpu_custom_call.1} parent=1 // pred_check_branch
      %91 = sbr.rel (0) target = $region25
    $region24: #{tpu_custom_call.1} parent=1 // pred_region
      _
    $region25: #{tpu_custom_call.1} parent=1 // pred_fallthru
      _
    %92 = vsyncpa [#allocation3], 1
    %93 = vsyncpa [#allocation5], 1

</llo_original>
